<compile_context>
chip_gen: v6e
topology: v6e:2x2x1
jax: 0.10.0
libtpu: 0.0.40
codegen_flags: <defaults>
</compile_context>

<pallas_src>
import functools
import math

import jax
import jax.numpy as jnp
from jax.experimental import pallas as pl
from jax.experimental.pallas import tpu as pltpu


def _round_up(a, m):
    return (a + m - 1) // m * m


def graph_conv_kernel(adj_ref, x_ref, w_ref, b_ref, out_ref, acc_ref, *,
                      aggregate_first, apply_relu):
    """One (row-tile i, reduction-tile k) step of out = act(adj @ x @ W + b)."""
    k = pl.program_id(1)

    @pl.when(k == 0)
    def _():
        acc_ref[...] = jnp.zeros_like(acc_ref)

    a = adj_ref[...]          # [tm, tk]    bf16
    xk = x_ref[...]           # [tk, F_in]  bf16

    if aggregate_first:
        # acc[tm, F_in] += adj_tile @ x_tile ; project through W once at the end.
        acc_ref[...] += jnp.dot(a, xk, preferred_element_type=jnp.float32)
    else:
        # acc[tm, F_out] += adj_tile @ (x_tile @ W)
        # (x_tile @ W is recomputed per row tile; fine while the row grid is
        #  small — precompute support in a separate pass for very large N.)
        sup = jnp.dot(xk, w_ref[...], preferred_element_type=jnp.float32)
        acc_ref[...] += jnp.dot(a, sup.astype(jnp.bfloat16),
                                preferred_element_type=jnp.float32)

    @pl.when(k == pl.num_programs(1) - 1)
    def _():
        if aggregate_first:
            y = jnp.dot(acc_ref[...].astype(jnp.bfloat16), w_ref[...],
                        preferred_element_type=jnp.float32)
        else:
            y = acc_ref[...]
        y = y + b_ref[...]
        if apply_relu:
            y = jnp.maximum(y, 0.0)
        out_ref[...] = y.astype(out_ref.dtype)


def graph_convolution(x, adj, w, b, *, apply_relu, out_dtype=jnp.float32,
                      tile_rows=None, tile_k=None, vmem_limit_bytes=None):
    """out = act(adj @ x @ W + b) as a tiled Pallas kernel (bf16 MXU, f32 acc)."""
    n, f_in = x.shape
    f_out = w.shape[1]
    assert adj.shape == (n, n)

    # Lane-dense output: pad F_out to a multiple of 128 so the store is an
    # unmasked vst; sliced off at the end.
    f_out_pad = _round_up(f_out, 128)

    # Tile sizes (multiples of 16 to satisfy bf16 sublane packing). 128 keeps
    # MXU-sized tiles that fit every generation's scoped VMEM; bump on v6e.
    tm = tile_rows if tile_rows is not None else min(128, _round_up(n, 16))
    tk = tile_k if tile_k is not None else min(128, _round_up(n, 16))
    n_pad_m = _round_up(n, tm)
    n_pad_k = _round_up(n, tk)

    # Pick the cheaper contraction order for the N^2 aggregation.
    aggregate_first = f_in <= f_out
    f_acc = f_in if aggregate_first else f_out_pad

    # Zero-pad inputs (padded rows/cols contribute nothing); cast matmul
    # operands to bf16, keep bias in f32.
    adj_p = jnp.zeros((n_pad_m, n_pad_k), jnp.bfloat16).at[:n, :n].set(
        adj.astype(jnp.bfloat16))
    x_p = jnp.zeros((n_pad_k, f_in), jnp.bfloat16).at[:n, :].set(
        x.astype(jnp.bfloat16))
    w_p = jnp.zeros((f_in, f_out_pad), jnp.bfloat16).at[:, :f_out].set(
        w.astype(jnp.bfloat16))
    b_p = jnp.zeros((1, f_out_pad), jnp.float32).at[0, :f_out].set(
        b.astype(jnp.float32))

    grid = (n_pad_m // tm, n_pad_k // tk)
    kernel = functools.partial(graph_conv_kernel,
                               aggregate_first=aggregate_first,
                               apply_relu=apply_relu)

    out_p = pl.pallas_call(
        kernel,
        out_shape=jax.ShapeDtypeStruct((n_pad_m, f_out_pad), out_dtype),
        grid=grid,
        in_specs=[
            pl.BlockSpec((tm, tk), lambda i, k: (i, k)),           # adj tile
            pl.BlockSpec((tk, f_in), lambda i, k: (k, 0)),         # x rows of k-tile
            pl.BlockSpec((f_in, f_out_pad), lambda i, k: (0, 0)),  # W (resident)
            pl.BlockSpec((1, f_out_pad), lambda i, k: (0, 0)),     # bias (resident)
        ],
        out_specs=pl.BlockSpec((tm, f_out_pad), lambda i, k: (i, 0)),
        scratch_shapes=[pltpu.VMEM((tm, f_acc), jnp.float32)],
        compiler_params=pltpu.CompilerParams(
            dimension_semantics=("parallel", "arbitrary"),
            vmem_limit_bytes=vmem_limit_bytes),
    )(adj_p, x_p, w_p, b_p)

    return out_p[:n, :f_out]


def gcn_forward(x, adj, w1, b1, w2, b2):
    # Layer 1: GraphConvolution(nfeat, nhid) + ReLU. nfeat <= nhid ->
    # aggregate-first order; keep h in bf16 (it is a matmul input for layer 2).
    h = graph_convolution(x, adj, w1, b1, apply_relu=True,
                          out_dtype=jnp.bfloat16)
    # F.dropout(h, p, training): identity at inference.
    # TODO(synk): training-mode dropout (pltpu.prng_seed + prng_random_bits
    # masking between the layers) not implemented; eval semantics only.
    # Layer 2: GraphConvolution(nhid, out). nhid > nout -> transform-first.
    out = graph_convolution(h, adj, w2, b2, apply_relu=False,
                            out_dtype=jnp.float32)
    return out


def init_gc_params(key, in_features, out_features):
    """Deterministic init matching Kipf's reset_parameters: U(-stdv, stdv)."""
    stdv = 1.0 / math.sqrt(out_features)
    kw, kb = jax.random.split(key)
    w = jax.random.uniform(kw, (in_features, out_features),
                           minval=-stdv, maxval=stdv, dtype=jnp.float32)
    b = jax.random.uniform(kb, (out_features,),
                           minval=-stdv, maxval=stdv, dtype=jnp.float32)
    return w, b


if __name__ == "__main__":
    # Small, module-consistent shapes: N nodes, nfeat -> nhid -> nout
    N, nfeat, nhid, nout = 16, 32, 64, 8
    dropout = 0.5  # unused at inference

    key = jax.random.PRNGKey(0)
    kx, kadj, k1, k2 = jax.random.split(key, 4)

    x = jax.random.normal(kx, (N, nfeat), dtype=jnp.float32)

    # symmetric-normalized random adjacency (dense), deterministic
    a = (jax.random.uniform(kadj, (N, N)) < 0.3).astype(jnp.float32)
    a = jnp.maximum(a, a.T) + jnp.eye(N, dtype=jnp.float32)   # add self-loops
    deg = jnp.sum(a, axis=1)
    dinv = 1.0 / jnp.sqrt(deg)
    adj = a * dinv[:, None] * dinv[None, :]

    w1, b1 = init_gc_params(k1, nfeat, nhid)
    w2, b2 = init_gc_params(k2, nhid, nout)

    out = jax.jit(gcn_forward)(x, adj, w1, b1, w2, b2)
    jax.block_until_ready(out)

    # reference check in plain JAX (f32); loose tolerance for bf16 MXU inputs
    h_ref = jnp.maximum(adj @ (x @ w1) + b1, 0.0)
    out_ref = adj @ (h_ref @ w2) + b2
    assert out.shape == out_ref.shape
    assert jnp.allclose(out, out_ref, atol=5e-2, rtol=5e-2), "mismatch vs reference"

    print("KERNEL_OK")
</pallas_src>

<mosaic_0001>
module attributes {stable_mosaic.version = 11 : i64} {
  func.func @graph_conv_kernel(%arg0: i32, %arg1: i32, %arg2: memref<16x16xbf16, #tpu.memory_space<vmem>>, %arg3: memref<16x32xbf16, #tpu.memory_space<vmem>>, %arg4: memref<32x128xbf16, #tpu.memory_space<vmem>>, %arg5: memref<1x128xf32, #tpu.memory_space<vmem>>, %arg6: memref<16x128xbf16, #tpu.memory_space<vmem>>, %arg7: memref<16x32xf32, #tpu.memory_space<vmem>>) attributes {dimension_semantics = [#tpu.dimension_semantics<parallel>, #tpu.dimension_semantics<arbitrary>], iteration_bounds = array<i64: 1, 1>, scalar_prefetch = 0 : i64, scratch_operands = 1 : i64, tpu.core_type = #tpu.core_type<tc>, window_params = [{transform_indices = @transform_0, window_bounds = array<i64: 16, 16>}, {transform_indices = @transform_1, window_bounds = array<i64: 16, 32>}, {pipeline_mode = #tpu.pipeline_mode<synchronous>, transform_indices = @transform_2, window_bounds = array<i64: 32, 128>}, {pipeline_mode = #tpu.pipeline_mode<synchronous>, transform_indices = @transform_3, window_bounds = array<i64: 1, 128>}, {transform_indices = @transform_4, window_bounds = array<i64: 16, 128>}]} {
    %c0_i32 = arith.constant 0 : i32
    %0 = arith.cmpi eq, %arg1, %c0_i32 : i32
    %1 = arith.extui %0 : i1 to i32
    %c0_i32_0 = arith.constant 0 : i32
    %2 = arith.cmpi ne, %1, %c0_i32_0 : i32
    scf.if %2 {
      %cst_10 = arith.constant 0.000000e+00 : f32
      %12 = vector.broadcast %cst_10 : f32 to vector<16x32xf32>
      %c0_11 = arith.constant 0 : index
      %c0_12 = arith.constant 0 : index
      %13 = vector.load %arg7[%c0_11, %c0_12] : memref<16x32xf32, #tpu.memory_space<vmem>>, vector<16x32xf32>
      tpu.vector_store %arg7[%c0_11, %c0_12], %12 {strides = array<i32>} : memref<16x32xf32, #tpu.memory_space<vmem>>, vector<16x32xf32>,
    } else {
    }
    %c0 = arith.constant 0 : index
    %c0_1 = arith.constant 0 : index
    %3 = vector.load %arg2[%c0, %c0_1] : memref<16x16xbf16, #tpu.memory_space<vmem>>, vector<16x16xbf16>
    %c0_2 = arith.constant 0 : index
    %c0_3 = arith.constant 0 : index
    %4 = vector.load %arg3[%c0_2, %c0_3] : memref<16x32xbf16, #tpu.memory_space<vmem>>, vector<16x32xbf16>
    %c0_4 = arith.constant 0 : index
    %c0_5 = arith.constant 0 : index
    %5 = vector.load %arg7[%c0_4, %c0_5] : memref<16x32xf32, #tpu.memory_space<vmem>>, vector<16x32xf32>
    %cst = arith.constant dense<0.000000e+00> : vector<16x32xf32>
    %6 = tpu.matmul %3, %4, %cst {dimension_numbers = #tpu.dot_dimension_numbers<[1], [0], [0], [1], [0, 0, 1, 1], [], []>} : vector<16x16xbf16>, vector<16x32xbf16>, vector<16x32xf32> -> vector<16x32xf32>
    %7 = arith.addf %5, %6 : vector<16x32xf32>
    %c0_6 = arith.constant 0 : index
    %c0_7 = arith.constant 0 : index
    %8 = vector.load %arg7[%c0_6, %c0_7] : memref<16x32xf32, #tpu.memory_space<vmem>>, vector<16x32xf32>
    tpu.vector_store %arg7[%c0_6, %c0_7], %7 {strides = array<i32>} : memref<16x32xf32, #tpu.memory_space<vmem>>, vector<16x32xf32>,
    %c0_i32_8 = arith.constant 0 : i32
    %9 = arith.cmpi eq, %arg1, %c0_i32_8 : i32
    %10 = arith.extui %9 : i1 to i32
    %c0_i32_9 = arith.constant 0 : i32
    %11 = arith.cmpi ne, %10, %c0_i32_9 : i32
    scf.if %11 {
      %c0_10 = arith.constant 0 : index
      %c0_11 = arith.constant 0 : index
      %12 = vector.load %arg7[%c0_10, %c0_11] : memref<16x32xf32, #tpu.memory_space<vmem>>, vector<16x32xf32>
      %13 = arith.truncf %12 : vector<16x32xf32> to vector<16x32xbf16>
      %c0_12 = arith.constant 0 : index
      %c0_13 = arith.constant 0 : index
      %14 = vector.load %arg4[%c0_12, %c0_13] : memref<32x128xbf16, #tpu.memory_space<vmem>>, vector<32x128xbf16>
      %cst_14 = arith.constant dense<0.000000e+00> : vector<16x128xf32>
      %15 = tpu.matmul %13, %14, %cst_14 {dimension_numbers = #tpu.dot_dimension_numbers<[1], [0], [0], [1], [0, 0, 1, 1], [], []>} : vector<16x32xbf16>, vector<32x128xbf16>, vector<16x128xf32> -> vector<16x128xf32>
      %c0_15 = arith.constant 0 : index
      %c0_16 = arith.constant 0 : index
      %16 = vector.load %arg5[%c0_15, %c0_16] : memref<1x128xf32, #tpu.memory_space<vmem>>, vector<1x128xf32>
      %17 = vector.broadcast %16 : vector<1x128xf32> to vector<16x128xf32>
      %18 = arith.addf %15, %17 : vector<16x128xf32>
      %cst_17 = arith.constant 0.000000e+00 : f32
      %19 = vector.broadcast %cst_17 : f32 to vector<16x128xf32>
      %20 = arith.maximumf %18, %19 : vector<16x128xf32>
      %21 = arith.truncf %20 : vector<16x128xf32> to vector<16x128xbf16>
      %c0_18 = arith.constant 0 : index
      %c0_19 = arith.constant 0 : index
      %22 = vector.load %arg6[%c0_18, %c0_19] : memref<16x128xbf16, #tpu.memory_space<vmem>>, vector<16x128xbf16>
      tpu.vector_store %arg6[%c0_18, %c0_19], %21 {strides = array<i32>} : memref<16x128xbf16, #tpu.memory_space<vmem>>, vector<16x128xbf16>,
    } else {
    }
    return
  }
  func.func @transform_0(%arg0: i32, %arg1: i32) -> (i32, i32) {
    %c0_i32 = arith.constant 0 : i32
    return %arg0, %arg1 : i32, i32
  }
  func.func @transform_1(%arg0: i32, %arg1: i32) -> (i32, i32) {
    %c0_i32 = arith.constant 0 : i32
    %c0_i32_0 = arith.constant 0 : i32
    return %arg1, %c0_i32 : i32, i32
  }
  func.func @transform_2(%arg0: i32, %arg1: i32) -> (i32, i32) {
    %c0_i32 = arith.constant 0 : i32
    %c0_i32_0 = arith.constant 0 : i32
    %c0_i32_1 = arith.constant 0 : i32
    return %c0_i32, %c0_i32_0 : i32, i32
  }
  func.func @transform_3(%arg0: i32, %arg1: i32) -> (i32, i32) {
    %c0_i32 = arith.constant 0 : i32
    %c0_i32_0 = arith.constant 0 : i32
    %c0_i32_1 = arith.constant 0 : i32
    return %c0_i32, %c0_i32_0 : i32, i32
  }
  func.func @transform_4(%arg0: i32, %arg1: i32) -> (i32, i32) {
    %c0_i32 = arith.constant 0 : i32
    %c0_i32_0 = arith.constant 0 : i32
    return %arg0, %c0_i32 : i32, i32
  }
}

module attributes {stable_mosaic.version = 11 : i64} {
  func.func @graph_conv_kernel(%arg0: i32, %arg1: i32, %arg2: memref<16x16xbf16, #tpu.memory_space<vmem>>, %arg3: memref<16x64xbf16, #tpu.memory_space<vmem>>, %arg4: memref<64x128xbf16, #tpu.memory_space<vmem>>, %arg5: memref<1x128xf32, #tpu.memory_space<vmem>>, %arg6: memref<16x128xf32, #tpu.memory_space<vmem>>, %arg7: memref<16x128xf32, #tpu.memory_space<vmem>>) attributes {dimension_semantics = [#tpu.dimension_semantics<parallel>, #tpu.dimension_semantics<arbitrary>], iteration_bounds = array<i64: 1, 1>, scalar_prefetch = 0 : i64, scratch_operands = 1 : i64, tpu.core_type = #tpu.core_type<tc>, window_params = [{transform_indices = @transform_0, window_bounds = array<i64: 16, 16>}, {transform_indices = @transform_1, window_bounds = array<i64: 16, 64>}, {pipeline_mode = #tpu.pipeline_mode<synchronous>, transform_indices = @transform_2, window_bounds = array<i64: 64, 128>}, {pipeline_mode = #tpu.pipeline_mode<synchronous>, transform_indices = @transform_3, window_bounds = array<i64: 1, 128>}, {transform_indices = @transform_4, window_bounds = array<i64: 16, 128>}]} {
    %c0_i32 = arith.constant 0 : i32
    %0 = arith.cmpi eq, %arg1, %c0_i32 : i32
    %1 = arith.extui %0 : i1 to i32
    %c0_i32_0 = arith.constant 0 : i32
    %2 = arith.cmpi ne, %1, %c0_i32_0 : i32
    scf.if %2 {
      %cst_13 = arith.constant 0.000000e+00 : f32
      %15 = vector.broadcast %cst_13 : f32 to vector<16x128xf32>
      %c0_14 = arith.constant 0 : index
      %c0_15 = arith.constant 0 : index
      %16 = vector.load %arg7[%c0_14, %c0_15] : memref<16x128xf32, #tpu.memory_space<vmem>>, vector<16x128xf32>
      tpu.vector_store %arg7[%c0_14, %c0_15], %15 {strides = array<i32>} : memref<16x128xf32, #tpu.memory_space<vmem>>, vector<16x128xf32>,
    } else {
    }
    %c0 = arith.constant 0 : index
    %c0_1 = arith.constant 0 : index
    %3 = vector.load %arg2[%c0, %c0_1] : memref<16x16xbf16, #tpu.memory_space<vmem>>, vector<16x16xbf16>
    %c0_2 = arith.constant 0 : index
    %c0_3 = arith.constant 0 : index
    %4 = vector.load %arg3[%c0_2, %c0_3] : memref<16x64xbf16, #tpu.memory_space<vmem>>, vector<16x64xbf16>
    %c0_4 = arith.constant 0 : index
    %c0_5 = arith.constant 0 : index
    %5 = vector.load %arg4[%c0_4, %c0_5] : memref<64x128xbf16, #tpu.memory_space<vmem>>, vector<64x128xbf16>
    %cst = arith.constant dense<0.000000e+00> : vector<16x128xf32>
    %6 = tpu.matmul %4, %5, %cst {dimension_numbers = #tpu.dot_dimension_numbers<[1], [0], [0], [1], [0, 0, 1, 1], [], []>} : vector<16x64xbf16>, vector<64x128xbf16>, vector<16x128xf32> -> vector<16x128xf32>
    %c0_6 = arith.constant 0 : index
    %c0_7 = arith.constant 0 : index
    %7 = vector.load %arg7[%c0_6, %c0_7] : memref<16x128xf32, #tpu.memory_space<vmem>>, vector<16x128xf32>
    %8 = arith.truncf %6 : vector<16x128xf32> to vector<16x128xbf16>
    %cst_8 = arith.constant dense<0.000000e+00> : vector<16x128xf32>
    %9 = tpu.matmul %3, %8, %cst_8 {dimension_numbers = #tpu.dot_dimension_numbers<[1], [0], [0], [1], [0, 0, 1, 1], [], []>} : vector<16x16xbf16>, vector<16x128xbf16>, vector<16x128xf32> -> vector<16x128xf32>
    %10 = arith.addf %7, %9 : vector<16x128xf32>
    %c0_9 = arith.constant 0 : index
    %c0_10 = arith.constant 0 : index
    %11 = vector.load %arg7[%c0_9, %c0_10] : memref<16x128xf32, #tpu.memory_space<vmem>>, vector<16x128xf32>
    tpu.vector_store %arg7[%c0_9, %c0_10], %10 {strides = array<i32>} : memref<16x128xf32, #tpu.memory_space<vmem>>, vector<16x128xf32>,
    %c0_i32_11 = arith.constant 0 : i32
    %12 = arith.cmpi eq, %arg1, %c0_i32_11 : i32
    %13 = arith.extui %12 : i1 to i32
    %c0_i32_12 = arith.constant 0 : i32
    %14 = arith.cmpi ne, %13, %c0_i32_12 : i32
    scf.if %14 {
      %c0_13 = arith.constant 0 : index
      %c0_14 = arith.constant 0 : index
      %15 = vector.load %arg7[%c0_13, %c0_14] : memref<16x128xf32, #tpu.memory_space<vmem>>, vector<16x128xf32>
      %c0_15 = arith.constant 0 : index
      %c0_16 = arith.constant 0 : index
      %16 = vector.load %arg5[%c0_15, %c0_16] : memref<1x128xf32, #tpu.memory_space<vmem>>, vector<1x128xf32>
      %17 = vector.broadcast %16 : vector<1x128xf32> to vector<16x128xf32>
      %18 = arith.addf %15, %17 : vector<16x128xf32>
      %c0_17 = arith.constant 0 : index
      %c0_18 = arith.constant 0 : index
      %19 = vector.load %arg6[%c0_17, %c0_18] : memref<16x128xf32, #tpu.memory_space<vmem>>, vector<16x128xf32>
      tpu.vector_store %arg6[%c0_17, %c0_18], %18 {strides = array<i32>} : memref<16x128xf32, #tpu.memory_space<vmem>>, vector<16x128xf32>,
    } else {
    }
    return
  }
  func.func @transform_0(%arg0: i32, %arg1: i32) -> (i32, i32) {
    %c0_i32 = arith.constant 0 : i32
    return %arg0, %arg1 : i32, i32
  }
  func.func @transform_1(%arg0: i32, %arg1: i32) -> (i32, i32) {
    %c0_i32 = arith.constant 0 : i32
    %c0_i32_0 = arith.constant 0 : i32
    return %arg1, %c0_i32 : i32, i32
  }
  func.func @transform_2(%arg0: i32, %arg1: i32) -> (i32, i32) {
    %c0_i32 = arith.constant 0 : i32
    %c0_i32_0 = arith.constant 0 : i32
    %c0_i32_1 = arith.constant 0 : i32
    return %c0_i32, %c0_i32_0 : i32, i32
  }
  func.func @transform_3(%arg0: i32, %arg1: i32) -> (i32, i32) {
    %c0_i32 = arith.constant 0 : i32
    %c0_i32_0 = arith.constant 0 : i32
    %c0_i32_1 = arith.constant 0 : i32
    return %c0_i32, %c0_i32_0 : i32, i32
  }
  func.func @transform_4(%arg0: i32, %arg1: i32) -> (i32, i32) {
    %c0_i32 = arith.constant 0 : i32
    %c0_i32_0 = arith.constant 0 : i32
    return %arg0, %c0_i32 : i32, i32
  }
}

</mosaic_0001>

<llo_original>
// kernel: gcn_forward.3
$region0: #{gcn_forward.3}
  #allocation0 [shape = 'u32[]', space=smem, size = 0x4, offset = 0x4, fixed_abs, tag = 'smem constant byte address 0x4 - core index']
  #allocation1 [shape = 'u32[144,128]{1,0:T(1,128)}', space=vmem, size = 0x12000, scoped, tag = 'internal scratch']
  #allocation2 [shape = 'f32[16,128]{1,0:T(8,128)}', space=vmem, size = 0x2000, scoped, tag = 'scratch operand']
  %s0 = inlined_call_operand.vmem [shape: bf16[16,16], index: 0, kind: input, shape index: {}]
  %s1 = inlined_call_operand.vmem [shape: bf16[16,64], index: 1, kind: input, shape index: {}]
  %s2 = inlined_call_operand.vmem [shape: bf16[64,128], index: 2, kind: input, shape index: {}]
  %s3 = inlined_call_operand.vmem [shape: f32[1,128], index: 3, kind: input, shape index: {}]
  %s4 = inlined_call_operand.vmem [shape: f32[16,128], index: 4, kind: output, shape index: {}]
  %s5 = sld [smem:[#allocation0]]
  $region34: #{gcn_forward.3} parent=0
    _
  %s7 = ssub.s32 1, %s5
  %s8 = scalar_select 0, %s7, %s5
  // Predicated region
  $region2: #{gcn_forward.3} parent=0 // pred_check
    _
  $region3: #{gcn_forward.3} parent=0 // pred_check_branch
    %10 = sbr.rel (0) target = $region5
  $region4: #{gcn_forward.3} parent=0 // pred_region
    _
  $region5: #{gcn_forward.3} parent=0 // pred_fallthru
    _
  // Predicated region
  $region6: #{gcn_forward.3} parent=0 // pred_check
    _
  $region7: #{gcn_forward.3} parent=0 // pred_check_branch
    %12 = sbr.rel (0) target = $region9
  $region8: #{gcn_forward.3} parent=0 // pred_region
    _
  $region9: #{gcn_forward.3} parent=0 // pred_fallthru
    _
  // Predicated region
  $region10: #{gcn_forward.3} parent=0 // pred_check
    _
  $region11: #{gcn_forward.3} parent=0 // pred_check_branch
    %14 = sbr.rel (0) target = $region13
  $region12: #{gcn_forward.3} parent=0 // pred_region
    _
  $region13: #{gcn_forward.3} parent=0 // pred_fallthru
    _
  // Predicated region
  $region14: #{gcn_forward.3} parent=0 // pred_check
    _
  $region15: #{gcn_forward.3} parent=0 // pred_check_branch
    %16 = sbr.rel (0) target = $region17
  $region16: #{gcn_forward.3} parent=0 // pred_region
    _
  $region17: #{gcn_forward.3} parent=0 // pred_fallthru
    _
  %p18 = scmp.eq.s32.totalorder 0, 0
  // Predicated region
  $region18: #{gcn_forward.3} parent=0 // pred_check
    %p19 = pneg %p18
  $region19: #{gcn_forward.3} parent=0 // pred_check_branch
    %21 = sbr.rel (%p19) target = $region21
  $region20: #{gcn_forward.3} parent=0 // pred_region
    %22 = vst [vmem:[#allocation2] sm:$0xff] 0.0
    %23 = vst [vmem:[#allocation2 + $0x8] sm:$0xff] 0.0
  $region21: #{gcn_forward.3} parent=0 // pred_fallthru
    _
  %v24 = vld [vmem:[%s0] sm:$0xf]
  %v25 = vld [vmem:[%s0 + $0x4] sm:$0xf]
  %v26 = vld [vmem:[%s1] sm:$0xf]
  %v27 = vld [vmem:[%s1 + $0x4] sm:$0xf]
  %v28 = vld [vmem:[%s2] sm:$0xf]
  %v29 = vld [vmem:[%s2 + $0x4] sm:$0xf]
  %v30 = vld [vmem:[%s2 + $0x8] sm:$0xf]
  %v31 = vld [vmem:[%s2 + $0xc] sm:$0xf]
  %v32 = vld [vmem:[%s2 + $0x10] sm:$0xf]
  %v33 = vld [vmem:[%s2 + $0x14] sm:$0xf]
  %v34 = vld [vmem:[%s2 + $0x18] sm:$0xf]
  %v35 = vld [vmem:[%s2 + $0x1c] sm:$0xf]
  %v38 = vunpack.c.l.b16 %v26
  %v39 = vunpack.c.l.b16 %v27
  %v40 = vpack.c.b16 %v39, %v38
  %v49 = vunpack.c.l.b16 %v28
  %v50 = vunpack.c.l.b16 %v29
  %v51 = vunpack.c.l.b16 %v30
  %v52 = vunpack.c.l.b16 %v31
  %v53 = vunpack.c.l.b16 %v32
  %v54 = vunpack.c.l.b16 %v33
  %v55 = vunpack.c.l.b16 %v34
  %v56 = vunpack.c.l.b16 %v35
  %v57 = vpack.c.b16 %v50, %v49
  %v58 = vpack.c.b16 %v52, %v51
  %v59 = vpack.c.b16 %v54, %v53
  %v60 = vpack.c.b16 %v56, %v55
  %vm65 = vcmask 523264
  %v67 = vsel %vm65, %v40, 0
  %69 = vmatprep.subr.bf16.mxu0 0
  %70 = vmatpush1.bf16.msra.mxu0 0
  %71 = vmatprep.subr.bf16.mxu0 0
  %72 = vmatpush1.bf16.msra.mxu0 0
  %73 = vmatprep.subr.bf16.mxu0 0
  %74 = vmatpush1.bf16.msra.mxu0 0
  %75 = vmatprep.subr.bf16.mxu0 0
  %76 = vmatpush1.bf16.msra.mxu0 0
  %77 = vmatprep.subr.bf16.mxu0 0
  %78 = vmatpush1.bf16.msra.mxu0 %v60
  %79 = vmatprep.subr.bf16.mxu0 0
  %80 = vmatpush1.bf16.msra.mxu0 %v59
  %81 = vmatprep.subr.bf16.mxu0 0
  %82 = vmatpush1.bf16.msra.mxu0 %v58
  %83 = vmatprep.subr.bf16.mxu0 0
  %84 = vmatpush1.bf16.msra.mxu0 %v57
  %85 = vmatprep.subr.bf16.mxu0 0
  %86 = vmatpush2.bf16.msra.mxu0 0
  %87 = vmatprep.subr.bf16.mxu0 0
  %88 = vmatpush2.bf16.msra.mxu0 0
  %89 = vmatprep.subr.bf16.mxu0 0
  %90 = vmatpush2.bf16.msra.mxu0 0
  %91 = vmatprep.subr.bf16.mxu0 0
  %92 = vmatpush2.bf16.msra.mxu0 0
  %93 = vmatprep.subr.bf16.mxu0 0
  %94 = vmatpush2.bf16.msra.mxu0 0
  %95 = vmatprep.subr.bf16.mxu0 0
  %96 = vmatpush2.bf16.msra.mxu0 0
  %97 = vmatprep.subr.bf16.mxu0 0
  %98 = vmatpush2.bf16.msra.mxu0 0
  %99 = vmatprep.subr.bf16.mxu0 0
  %100 = vmatpush2.bf16.msra.mxu0 0
  %101 = vmatprep.mubr.bf16.mxu0 0
  %102 = vmatmul.mubr.bf16.gmra.mxu0 %v67
  %v103 = vpop.f32.mrf.mxu0
  %v104 = vadd.f32 0.0, %v103
  %v105 = vpop.f32.mrf.mxu0
  %v106 = vpop.f32.mrf.mxu0
  %v107 = vadd.f32 0.0, %v106
  %v108 = vpop.f32.mrf.mxu0
  %109 = vdwg.mxu0
  %v110 = vld [vmem:[#allocation2] sm:$0xff]
  %v111 = vld [vmem:[#allocation2 + $0x8] sm:$0xff]
  %v112 = vpack.c.bf16 %v107, %v104
  %v115 = vunpack.c.l.b16 %v24
  %v116 = vunpack.c.l.b16 %v25
  %v117 = vpack.c.b16 %v116, %v115
  %vm118 = vcmask 130048
  %v120 = vsel %vm118, %v117, 0
  %122 = vmatprep.subr.bf16.mxu0 0
  %123 = vmatpush1.bf16.msra.mxu0 0
  %124 = vmatprep.subr.bf16.mxu0 0
  %125 = vmatpush1.bf16.msra.mxu0 0
  %126 = vmatprep.subr.bf16.mxu0 0
  %127 = vmatpush1.bf16.msra.mxu0 0
  %128 = vmatprep.subr.bf16.mxu0 0
  %129 = vmatpush1.bf16.msra.mxu0 0
  %130 = vmatprep.subr.bf16.mxu0 0
  %131 = vmatpush1.bf16.msra.mxu0 0
  %132 = vmatprep.subr.bf16.mxu0 0
  %133 = vmatpush1.bf16.msra.mxu0 0
  %134 = vmatprep.subr.bf16.mxu0 0
  %135 = vmatpush1.bf16.msra.mxu0 0
  %136 = vmatprep.subr.bf16.mxu0 0
  %137 = vmatpush1.bf16.msra.mxu0 %v112
  %138 = vmatprep.subr.bf16.mxu0 0
  %139 = vmatpush2.bf16.msra.mxu0 0
  %140 = vmatprep.subr.bf16.mxu0 0
  %141 = vmatpush2.bf16.msra.mxu0 0
  %142 = vmatprep.subr.bf16.mxu0 0
  %143 = vmatpush2.bf16.msra.mxu0 0
  %144 = vmatprep.subr.bf16.mxu0 0
  %145 = vmatpush2.bf16.msra.mxu0 0
  %146 = vmatprep.subr.bf16.mxu0 0
  %147 = vmatpush2.bf16.msra.mxu0 0
  %148 = vmatprep.subr.bf16.mxu0 0
  %149 = vmatpush2.bf16.msra.mxu0 0
  %150 = vmatprep.subr.bf16.mxu0 0
  %151 = vmatpush2.bf16.msra.mxu0 0
  %152 = vmatprep.subr.bf16.mxu0 0
  %153 = vmatpush2.bf16.msra.mxu0 0
  %154 = vmatprep.mubr.bf16.mxu0 0
  %155 = vmatmul.mubr.bf16.gmra.mxu0 %v120
  %v156 = vpop.f32.mrf.mxu0
  %v157 = vadd.f32 0.0, %v156
  %v158 = vpop.f32.mrf.mxu0
  %v159 = vpop.f32.mrf.mxu0
  %v160 = vadd.f32 0.0, %v159
  %v161 = vpop.f32.mrf.mxu0
  %162 = vdwg.mxu0
  %v163 = vadd.f32 %v110, %v157
  %v164 = vadd.f32 %v111, %v160
  %165 = vst [vmem:[#allocation2] sm:$0xff] %v163
  %166 = vst [vmem:[#allocation2 + $0x8] sm:$0xff] %v164
  // Predicated region
  $region22: #{gcn_forward.3} parent=0 // pred_check
    %p167 = pneg %p18
  $region23: #{gcn_forward.3} parent=0 // pred_check_branch
    %169 = sbr.rel (%p167) target = $region25
  $region24: #{gcn_forward.3} parent=0 // pred_region
    %v170 = vld [vmem:[#allocation2] sm:$0xff]
    %v171 = vld [vmem:[#allocation2 + $0x8] sm:$0xff]
    %v172 = vld [vmem:[%s3] sm:$0x1]
    %v174 = vlaneseq
    %v175 = vshrl.u32 %v174, 7
    %v176 = vsub.s32 0, %v175
    %v177 = vrot.slane %v172, %v176
    %v179 = vadd.f32 %v170, %v177
    %v180 = vadd.f32 %v171, %v177
    %181 = vst [vmem:[%s4] sm:$0xff] %v179
    %182 = vst [vmem:[%s4 + $0x8] sm:$0xff] %v180
  $region25: #{gcn_forward.3} parent=0 // pred_fallthru
    _
  // Predicated region
  $region26: #{gcn_forward.3} parent=0 // pred_check
    _
  $region27: #{gcn_forward.3} parent=0 // pred_check_branch
    %184 = sbr.rel (0) target = $region29
  $region28: #{gcn_forward.3} parent=0 // pred_region
    _
  $region29: #{gcn_forward.3} parent=0 // pred_fallthru
    _
  // Predicated region
  $region30: #{gcn_forward.3} parent=0 // pred_check
    _
  $region31: #{gcn_forward.3} parent=0 // pred_check_branch
    %186 = sbr.rel (0) target = $region33
  $region32: #{gcn_forward.3} parent=0 // pred_region
    _
  $region33: #{gcn_forward.3} parent=0 // pred_fallthru
    _

// kernel: gcn_forward.2
$region0: #{gcn_forward.2}
  #allocation0 [shape = 'u32[]', space=smem, size = 0x4, offset = 0x4, fixed_abs, tag = 'smem constant byte address 0x4 - core index']
  #allocation1 [shape = 'u32[144,128]{1,0:T(1,128)}', space=vmem, size = 0x12000, scoped, tag = 'internal scratch']
  #allocation2 [shape = 'f32[16,32]{1,0:T(8,128)}', space=vmem, size = 0x2000, scoped, tag = 'scratch operand']
  %s0 = inlined_call_operand.vmem [shape: bf16[16,16], index: 0, kind: input, shape index: {}]
  %s1 = inlined_call_operand.vmem [shape: bf16[16,32], index: 1, kind: input, shape index: {}]
  %s2 = inlined_call_operand.vmem [shape: bf16[32,128], index: 2, kind: input, shape index: {}]
  %s3 = inlined_call_operand.vmem [shape: f32[1,128], index: 3, kind: input, shape index: {}]
  %s4 = inlined_call_operand.vmem [shape: bf16[16,128], index: 4, kind: output, shape index: {}]
  %s5 = sld [smem:[#allocation0]]
  $region34: #{gcn_forward.2} parent=0
    _
  %s7 = ssub.s32 1, %s5
  %s8 = scalar_select 0, %s7, %s5
  // Predicated region
  $region2: #{gcn_forward.2} parent=0 // pred_check
    _
  $region3: #{gcn_forward.2} parent=0 // pred_check_branch
    %10 = sbr.rel (0) target = $region5
  $region4: #{gcn_forward.2} parent=0 // pred_region
    _
  $region5: #{gcn_forward.2} parent=0 // pred_fallthru
    _
  // Predicated region
  $region6: #{gcn_forward.2} parent=0 // pred_check
    _
  $region7: #{gcn_forward.2} parent=0 // pred_check_branch
    %12 = sbr.rel (0) target = $region9
  $region8: #{gcn_forward.2} parent=0 // pred_region
    _
  $region9: #{gcn_forward.2} parent=0 // pred_fallthru
    _
  // Predicated region
  $region10: #{gcn_forward.2} parent=0 // pred_check
    _
  $region11: #{gcn_forward.2} parent=0 // pred_check_branch
    %14 = sbr.rel (0) target = $region13
  $region12: #{gcn_forward.2} parent=0 // pred_region
    _
  $region13: #{gcn_forward.2} parent=0 // pred_fallthru
    _
  // Predicated region
  $region14: #{gcn_forward.2} parent=0 // pred_check
    _
  $region15: #{gcn_forward.2} parent=0 // pred_check_branch
    %16 = sbr.rel (0) target = $region17
  $region16: #{gcn_forward.2} parent=0 // pred_region
    _
  $region17: #{gcn_forward.2} parent=0 // pred_fallthru
    _
  %p18 = scmp.eq.s32.totalorder 0, 0
  // Predicated region
  $region18: #{gcn_forward.2} parent=0 // pred_check
    %p19 = pneg %p18
  $region19: #{gcn_forward.2} parent=0 // pred_check_branch
    %21 = sbr.rel (%p19) target = $region21
  $region20: #{gcn_forward.2} parent=0 // pred_region
    %vm22 = vcmask 261120
    %23 = vst.msk [vmem:[#allocation2] sm:$0xff] %vm22, 0.0
    %24 = vst.msk [vmem:[#allocation2 + $0x8] sm:$0xff] %vm22, 0.0
  $region21: #{gcn_forward.2} parent=0 // pred_fallthru
    _
  %v25 = vld [vmem:[%s0] sm:$0xf]
  %v26 = vld [vmem:[%s0 + $0x4] sm:$0xf]
  %v27 = vld [vmem:[%s1] sm:$0xf]
  %v28 = vld [vmem:[%s1 + $0x4] sm:$0xf]
  %v29 = vld [vmem:[#allocation2] sm:$0xff]
  %v30 = vld [vmem:[#allocation2 + $0x8] sm:$0xff]
  %v33 = vunpack.c.l.b16 %v25
  %v34 = vunpack.c.l.b16 %v26
  %v35 = vpack.c.b16 %v34, %v33
  %v38 = vunpack.c.l.b16 %v27
  %v39 = vunpack.c.l.b16 %v28
  %v40 = vpack.c.b16 %v39, %v38
  %vm42 = vcmask 130048
  %v44 = vsel %vm42, %v35, 0
  %46 = vmatprep.subr.bf16.mxu0 0
  %47 = vmatpush1.bf16.msra.mxu0 0
  %48 = vmatprep.subr.bf16.mxu0 0
  %49 = vmatpush1.bf16.msra.mxu0 0
  %50 = vmatprep.subr.bf16.mxu0 0
  %51 = vmatpush1.bf16.msra.mxu0 0
  %52 = vmatprep.subr.bf16.mxu0 0
  %53 = vmatpush1.bf16.msra.mxu0 0
  %54 = vmatprep.subr.bf16.mxu0 0
  %55 = vmatpush1.bf16.msra.mxu0 0
  %56 = vmatprep.subr.bf16.mxu0 0
  %57 = vmatpush1.bf16.msra.mxu0 0
  %58 = vmatprep.subr.bf16.mxu0 0
  %59 = vmatpush1.bf16.msra.mxu0 0
  %60 = vmatprep.subr.bf16.mxu0 0
  %61 = vmatpush1.bf16.msra.mxu0 %v40
  %62 = vmatprep.subr.bf16.mxu0 0
  %63 = vmatpush2.bf16.msra.mxu0 0
  %64 = vmatprep.subr.bf16.mxu0 0
  %65 = vmatpush2.bf16.msra.mxu0 0
  %66 = vmatprep.subr.bf16.mxu0 0
  %67 = vmatpush2.bf16.msra.mxu0 0
  %68 = vmatprep.subr.bf16.mxu0 0
  %69 = vmatpush2.bf16.msra.mxu0 0
  %70 = vmatprep.subr.bf16.mxu0 0
  %71 = vmatpush2.bf16.msra.mxu0 0
  %72 = vmatprep.subr.bf16.mxu0 0
  %73 = vmatpush2.bf16.msra.mxu0 0
  %74 = vmatprep.subr.bf16.mxu0 0
  %75 = vmatpush2.bf16.msra.mxu0 0
  %76 = vmatprep.subr.bf16.mxu0 0
  %77 = vmatpush2.bf16.msra.mxu0 0
  %78 = vmatprep.mubr.bf16.mxu0 0
  %79 = vmatmul.mubr.bf16.gmra.mxu0 %v44
  %v80 = vpop.f32.mrf.mxu0
  %v81 = vadd.f32 0.0, %v80
  %v82 = vpop.f32.mrf.mxu0
  %v83 = vpop.f32.mrf.mxu0
  %v84 = vadd.f32 0.0, %v83
  %v85 = vpop.f32.mrf.mxu0
  %86 = vdwg.mxu0
  %v87 = vadd.f32 %v29, %v81
  %v88 = vadd.f32 %v30, %v84
  %vm89 = vcmask 261120
  %90 = vst.msk [vmem:[#allocation2] sm:$0xff] %vm89, %v87
  %91 = vst.msk [vmem:[#allocation2 + $0x8] sm:$0xff] %vm89, %v88
  // Predicated region
  $region22: #{gcn_forward.2} parent=0 // pred_check
    %p92 = pneg %p18
  $region23: #{gcn_forward.2} parent=0 // pred_check_branch
    %94 = sbr.rel (%p92) target = $region25
  $region24: #{gcn_forward.2} parent=0 // pred_region
    %v95 = vld [vmem:[#allocation2] sm:$0xff]
    %v96 = vld [vmem:[#allocation2 + $0x8] sm:$0xff]
    %v97 = vpack.c.bf16 %v96, %v95
    %v98 = vld [vmem:[%s2] sm:$0xf]
    %v99 = vld [vmem:[%s2 + $0x4] sm:$0xf]
    %v100 = vld [vmem:[%s2 + $0x8] sm:$0xf]
    %v101 = vld [vmem:[%s2 + $0xc] sm:$0xf]
    %v102 = vld [vmem:[%s3] sm:$0x1]
    %v104 = vlaneseq
    %v105 = vshrl.u32 %v104, 7
    %v106 = vsub.s32 0, %v105
    %v107 = vrot.slane %v102, %v106
    %v113 = vunpack.c.l.b16 %v98
    %v114 = vunpack.c.l.b16 %v99
    %v115 = vunpack.c.l.b16 %v100
    %v116 = vunpack.c.l.b16 %v101
    %v117 = vpack.c.b16 %v114, %v113
    %v118 = vpack.c.b16 %v116, %v115
    %v122 = vsel %vm89, %v97, 0
    %124 = vmatprep.subr.bf16.mxu0 0
    %125 = vmatpush1.bf16.msra.mxu0 0
    %126 = vmatprep.subr.bf16.mxu0 0
    %127 = vmatpush1.bf16.msra.mxu0 0
    %128 = vmatprep.subr.bf16.mxu0 0
    %129 = vmatpush1.bf16.msra.mxu0 0
    %130 = vmatprep.subr.bf16.mxu0 0
    %131 = vmatpush1.bf16.msra.mxu0 0
    %132 = vmatprep.subr.bf16.mxu0 0
    %133 = vmatpush1.bf16.msra.mxu0 0
    %134 = vmatprep.subr.bf16.mxu0 0
    %135 = vmatpush1.bf16.msra.mxu0 0
    %136 = vmatprep.subr.bf16.mxu0 0
    %137 = vmatpush1.bf16.msra.mxu0 %v118
    %138 = vmatprep.subr.bf16.mxu0 0
    %139 = vmatpush1.bf16.msra.mxu0 %v117
    %140 = vmatprep.subr.bf16.mxu0 0
    %141 = vmatpush2.bf16.msra.mxu0 0
    %142 = vmatprep.subr.bf16.mxu0 0
    %143 = vmatpush2.bf16.msra.mxu0 0
    %144 = vmatprep.subr.bf16.mxu0 0
    %145 = vmatpush2.bf16.msra.mxu0 0
    %146 = vmatprep.subr.bf16.mxu0 0
    %147 = vmatpush2.bf16.msra.mxu0 0
    %148 = vmatprep.subr.bf16.mxu0 0
    %149 = vmatpush2.bf16.msra.mxu0 0
    %150 = vmatprep.subr.bf16.mxu0 0
    %151 = vmatpush2.bf16.msra.mxu0 0
    %152 = vmatprep.subr.bf16.mxu0 0
    %153 = vmatpush2.bf16.msra.mxu0 0
    %154 = vmatprep.subr.bf16.mxu0 0
    %155 = vmatpush2.bf16.msra.mxu0 0
    %156 = vmatprep.mubr.bf16.mxu0 0
    %157 = vmatmul.mubr.bf16.gmra.mxu0 %v122
    %v158 = vpop.f32.mrf.mxu0
    %v159 = vadd.f32 %v107, %v158
    %v160 = vpop.f32.mrf.mxu0
    %v161 = vpop.f32.mrf.mxu0
    %v162 = vadd.f32 %v107, %v161
    %v163 = vpop.f32.mrf.mxu0
    %164 = vdwg.mxu0
    %v165 = vmax.f32 %v159, 0.0
    %v166 = vmax.f32 %v162, 0.0
    %v167 = vpack.c.bf16 %v166, %v165
    %v169 = vunpack.c.l.b16 %v167
    %v170 = vunpack.c.h.b16 %v167
    %v171 = vpack.c.b16 %v169, %v169
    %v172 = vpack.c.b16 %v170, %v170
    %175 = vst [vmem:[%s4] sm:$0xf] %v171
    %176 = vst [vmem:[%s4 + $0x4] sm:$0xf] %v172
  $region25: #{gcn_forward.2} parent=0 // pred_fallthru
    _
  // Predicated region
  $region26: #{gcn_forward.2} parent=0 // pred_check
    _
  $region27: #{gcn_forward.2} parent=0 // pred_check_branch
    %178 = sbr.rel (0) target = $region29
  $region28: #{gcn_forward.2} parent=0 // pred_region
    _
  $region29: #{gcn_forward.2} parent=0 // pred_fallthru
    _
  // Predicated region
  $region30: #{gcn_forward.2} parent=0 // pred_check
    _
  $region31: #{gcn_forward.2} parent=0 // pred_check_branch
    %180 = sbr.rel (0) target = $region33
  $region32: #{gcn_forward.2} parent=0 // pred_region
    _
  $region33: #{gcn_forward.2} parent=0 // pred_fallthru
    _

</llo_original>
